<compile_context>
chip_gen: v5e
topology: v5e:2x2
jax: 0.10.0
libtpu: 0.0.40
codegen_flags: <defaults>
</compile_context>

<pallas_src>
import jax
import jax.numpy as jnp
from jax.experimental import pallas as pl
from jax.experimental.pallas import tpu as pltpu

LANE = 128  # lane-dense padding width for all feature dims


def _round_up(n, m):
    return ((n + m - 1) // m) * m


def fused_sage_kernel(x_ref,
                      a0_ref, a1_ref, a2_ref,
                      wn0_ref, ws0_ref, wn1_ref, ws1_ref, wn2_ref, ws2_ref,
                      b0_ref, b1_ref, b2_ref,
                      out_ref):
    """Fused 3-layer GraphSAGE('mean') forward.

    All operands are pre-padded / pre-cast in the wrapper:
      x / A / W are lane-dense bf16, biases f32, output f32.
    Per layer (f32 MXU accumulation, f32 epilogue):
      out = (A @ h) @ W_neigh + h[:n_dst] @ W_self + bias   [+ ReLU]
    """

    def layer(a_ref, h, wn_ref, ws_ref, b_ref, relu):
        n_dst = a_ref.shape[0]
        # mean aggregation: rows of A are already 1/deg normalized.
        agg = jnp.dot(a_ref[...], h, preferred_element_type=jnp.float32)
        # DGL block convention: dst nodes are the prefix of src nodes ->
        # free static prefix slice of the in-VMEM activation (no extra DMA).
        h_dst = h[:n_dst, :]
        # Two MXU dots accumulated in f32 (no K=256 concat temp; v5e's MXU is
        # only 128 deep so the fused-K variant saves nothing there anyway).
        out = (jnp.dot(agg.astype(jnp.bfloat16), wn_ref[...],
                       preferred_element_type=jnp.float32)
               + jnp.dot(h_dst, ws_ref[...],
                         preferred_element_type=jnp.float32)
               + b_ref[...])                       # f32 epilogue
        if relu:
            out = jnp.maximum(out, 0.0)
        # TODO(synk): nn.Dropout(0.5) omitted (eval-mode identity); training
        #             would use pltpu.prng_seed + pltpu.stateful_bernoulli.
        return out

    h = x_ref[...]                                                     # bf16
    h = layer(a0_ref, h, wn0_ref, ws0_ref, b0_ref, True).astype(jnp.bfloat16)
    h = layer(a1_ref, h, wn1_ref, ws1_ref, b1_ref, True).astype(jnp.bfloat16)
    out_ref[...] = layer(a2_ref, h, wn2_ref, ws2_ref, b2_ref, False)   # f32


def pack_params(params):
    """Pad (W_neigh, W_self, bias) of every layer to lane-dense slabs and cast
    the weights to bf16.  Done ONCE at model init (hoisted off the call path)."""
    packed = []
    for wn, ws, b in params:
        d_in, d_out = wn.shape
        assert d_in <= LANE and d_out <= LANE
        wn_p = jnp.zeros((LANE, LANE), jnp.bfloat16).at[:d_in, :d_out].set(
            wn.astype(jnp.bfloat16))
        ws_p = jnp.zeros((LANE, LANE), jnp.bfloat16).at[:d_in, :d_out].set(
            ws.astype(jnp.bfloat16))
        b_p = jnp.zeros((1, LANE), jnp.float32).at[0, :d_out].set(
            b.astype(jnp.float32))
        packed.append((wn_p, ws_p, b_p))
    return packed


def make_sage_forward(params):
    """Build a jitted forward(blocks, x) closing over pre-packed parameters."""
    assert len(params) == 3
    packed = pack_params(params)
    n_classes = params[-1][0].shape[1]
    (wn0, ws0, b0), (wn1, ws1, b1), (wn2, ws2, b2) = packed

    @jax.jit
    def forward(blocks, x):
        assert len(blocks) == 3
        # dst of layer l must be (the prefix of) src of layer l+1.
        for l in range(2):
            assert blocks[l].shape[0] == blocks[l + 1].shape[1]
        for A in blocks:
            assert A.shape[0] <= A.shape[1]

        n_dst_final = blocks[-1].shape[0]

        # Padded node counts: every n_src (lane dim of A, row count of h) is
        # rounded to 128; the final n_dst only needs bf16 sublane alignment.
        n_src_pad = [_round_up(A.shape[1], LANE) for A in blocks]
        n_dst_pad = [n_src_pad[1], n_src_pad[2], _round_up(n_dst_final, 16)]

        def pad_to(a, rows, cols, dtype):
            return jnp.pad(a.astype(dtype),
                           ((0, rows - a.shape[0]), (0, cols - a.shape[1])))

        # Padded columns/rows of A are zero, so padded (junk) activation rows
        # never contaminate valid dst rows; junk is sliced off at the end.
        x_pad = pad_to(x, n_src_pad[0], LANE, jnp.bfloat16)
        a_pad = [pad_to(A, n_dst_pad[l], n_src_pad[l], jnp.bfloat16)
                 for l, A in enumerate(blocks)]

        # No grid: whole (tiny) arrays VMEM-resident, no pipeline machinery,
        # no double-buffering.
        vmem = pl.BlockSpec(memory_space=pltpu.MemorySpace.VMEM)
        out_pad = pl.pallas_call(
            fused_sage_kernel,
            out_shape=jax.ShapeDtypeStruct((n_dst_pad[-1], LANE), jnp.float32),
            in_specs=[vmem] * 13,
            out_specs=vmem,
        )(x_pad, *a_pad, wn0, ws0, wn1, ws1, wn2, ws2, b0, b1, b2)

        # slice the real logits out of the lane-dense slab (tiny, XLA side).
        return out_pad[:n_dst_final, :n_classes]

    return forward


def sage_reference(blocks, x, params):
    """Pure-JAX f32 reference for correctness checking."""
    h = x
    for l, (A, (wn, ws, b)) in enumerate(zip(blocks, params)):
        n_dst = A.shape[0]
        h = (A @ h) @ wn + h[:n_dst] @ ws + b
        if l != len(params) - 1:
            h = jnp.maximum(h, 0.0)
    return h


def make_block(key, n_dst, n_src):
    """Dense row-normalized mean-aggregation matrix for a bipartite block."""
    adj = jax.random.bernoulli(key, 0.3, (n_dst, n_src)).astype(jnp.float32)
    deg = jnp.maximum(adj.sum(axis=1, keepdims=True), 1.0)
    return adj / deg


if __name__ == "__main__":
    key = jax.random.PRNGKey(0)
    in_feats, n_hidden, n_classes = 16, 32, 8

    # fanout structure: layer l maps n_src[l] source nodes -> n_dst[l] dst
    # nodes, and dst of layer l are the (prefix) src of layer l+1.
    n_src_list = [64, 32, 16]
    n_dst_list = [32, 16, 8]
    layer_dims = [(in_feats, n_hidden), (n_hidden, n_hidden),
                  (n_hidden, n_classes)]

    keys = jax.random.split(key, 1 + 3 * 3)
    x = jax.random.normal(keys[0], (n_src_list[0], in_feats), dtype=jnp.float32)

    blocks, params = [], []
    for l in range(3):
        kb, kwn, kws = keys[1 + 3 * l: 1 + 3 * (l + 1)]
        d_in, d_out = layer_dims[l]
        blocks.append(make_block(kb, n_dst_list[l], n_src_list[l]))
        w_neigh = jax.random.normal(kwn, (d_in, d_out), dtype=jnp.float32) * 0.1
        w_self = jax.random.normal(kws, (d_in, d_out), dtype=jnp.float32) * 0.1
        bias = jnp.zeros((d_out,), dtype=jnp.float32)
        params.append((w_neigh, w_self, bias))

    forward = make_sage_forward(params)       # params packed once at init
    out = forward(tuple(blocks), x)
    jax.block_until_ready(out)
    assert out.shape == (n_dst_list[-1], n_classes)

    # correctness vs. f32 reference (bf16 A/x/W MXU operands -> loose tol).
    ref = sage_reference(blocks, x, params)
    max_err = float(jnp.max(jnp.abs(out - ref)))
    tol = 3e-2 * (1.0 + float(jnp.max(jnp.abs(ref))))
    assert max_err < tol, f"max_err={max_err} tol={tol}"

    print("KERNEL_OK")
</pallas_src>

<mosaic_0001>
module attributes {stable_mosaic.version = 11 : i64} {
  func.func @fused_sage_kernel(%arg0: memref<128x128xbf16, #tpu.memory_space<vmem>>, %arg1: memref<128x128xbf16, #tpu.memory_space<vmem>>, %arg2: memref<128x128xbf16, #tpu.memory_space<vmem>>, %arg3: memref<16x128xbf16, #tpu.memory_space<vmem>>, %arg4: memref<128x128xbf16, #tpu.memory_space<vmem>>, %arg5: memref<128x128xbf16, #tpu.memory_space<vmem>>, %arg6: memref<128x128xbf16, #tpu.memory_space<vmem>>, %arg7: memref<128x128xbf16, #tpu.memory_space<vmem>>, %arg8: memref<128x128xbf16, #tpu.memory_space<vmem>>, %arg9: memref<128x128xbf16, #tpu.memory_space<vmem>>, %arg10: memref<1x128xf32, #tpu.memory_space<vmem>>, %arg11: memref<1x128xf32, #tpu.memory_space<vmem>>, %arg12: memref<1x128xf32, #tpu.memory_space<vmem>>, %arg13: memref<16x128xf32, #tpu.memory_space<vmem>>) attributes {dimension_semantics = [], scalar_prefetch = 0 : i64, scratch_operands = 0 : i64, tpu.core_type = #tpu.core_type<tc>} {
    %c0 = arith.constant 0 : index
    %c0_0 = arith.constant 0 : index
    %0 = vector.load %arg0[%c0, %c0_0] : memref<128x128xbf16, #tpu.memory_space<vmem>>, vector<128x128xbf16>
    %c0_1 = arith.constant 0 : index
    %c0_2 = arith.constant 0 : index
    %1 = vector.load %arg1[%c0_1, %c0_2] : memref<128x128xbf16, #tpu.memory_space<vmem>>, vector<128x128xbf16>
    %cst = arith.constant dense<0.000000e+00> : vector<128x128xf32>
    %2 = tpu.matmul %1, %0, %cst {dimension_numbers = #tpu.dot_dimension_numbers<[1], [0], [0], [1], [0, 0, 1, 1], [], []>} : vector<128x128xbf16>, vector<128x128xbf16>, vector<128x128xf32> -> vector<128x128xf32>
    %3 = arith.truncf %2 : vector<128x128xf32> to vector<128x128xbf16>
    %c0_3 = arith.constant 0 : index
    %c0_4 = arith.constant 0 : index
    %4 = vector.load %arg4[%c0_3, %c0_4] : memref<128x128xbf16, #tpu.memory_space<vmem>>, vector<128x128xbf16>
    %cst_5 = arith.constant dense<0.000000e+00> : vector<128x128xf32>
    %5 = tpu.matmul %3, %4, %cst_5 {dimension_numbers = #tpu.dot_dimension_numbers<[1], [0], [0], [1], [0, 0, 1, 1], [], []>} : vector<128x128xbf16>, vector<128x128xbf16>, vector<128x128xf32> -> vector<128x128xf32>
    %c0_6 = arith.constant 0 : index
    %c0_7 = arith.constant 0 : index
    %6 = vector.load %arg5[%c0_6, %c0_7] : memref<128x128xbf16, #tpu.memory_space<vmem>>, vector<128x128xbf16>
    %cst_8 = arith.constant dense<0.000000e+00> : vector<128x128xf32>
    %7 = tpu.matmul %0, %6, %cst_8 {dimension_numbers = #tpu.dot_dimension_numbers<[1], [0], [0], [1], [0, 0, 1, 1], [], []>} : vector<128x128xbf16>, vector<128x128xbf16>, vector<128x128xf32> -> vector<128x128xf32>
    %8 = arith.addf %5, %7 : vector<128x128xf32>
    %c0_9 = arith.constant 0 : index
    %c0_10 = arith.constant 0 : index
    %9 = vector.load %arg10[%c0_9, %c0_10] : memref<1x128xf32, #tpu.memory_space<vmem>>, vector<1x128xf32>
    %10 = vector.broadcast %9 : vector<1x128xf32> to vector<128x128xf32>
    %11 = arith.addf %8, %10 : vector<128x128xf32>
    %cst_11 = arith.constant 0.000000e+00 : f32
    %12 = vector.broadcast %cst_11 : f32 to vector<128x128xf32>
    %13 = arith.maximumf %11, %12 : vector<128x128xf32>
    %14 = arith.truncf %13 : vector<128x128xf32> to vector<128x128xbf16>
    %c0_12 = arith.constant 0 : index
    %c0_13 = arith.constant 0 : index
    %15 = vector.load %arg2[%c0_12, %c0_13] : memref<128x128xbf16, #tpu.memory_space<vmem>>, vector<128x128xbf16>
    %cst_14 = arith.constant dense<0.000000e+00> : vector<128x128xf32>
    %16 = tpu.matmul %15, %14, %cst_14 {dimension_numbers = #tpu.dot_dimension_numbers<[1], [0], [0], [1], [0, 0, 1, 1], [], []>} : vector<128x128xbf16>, vector<128x128xbf16>, vector<128x128xf32> -> vector<128x128xf32>
    %17 = arith.truncf %16 : vector<128x128xf32> to vector<128x128xbf16>
    %c0_15 = arith.constant 0 : index
    %c0_16 = arith.constant 0 : index
    %18 = vector.load %arg6[%c0_15, %c0_16] : memref<128x128xbf16, #tpu.memory_space<vmem>>, vector<128x128xbf16>
    %cst_17 = arith.constant dense<0.000000e+00> : vector<128x128xf32>
    %19 = tpu.matmul %17, %18, %cst_17 {dimension_numbers = #tpu.dot_dimension_numbers<[1], [0], [0], [1], [0, 0, 1, 1], [], []>} : vector<128x128xbf16>, vector<128x128xbf16>, vector<128x128xf32> -> vector<128x128xf32>
    %c0_18 = arith.constant 0 : index
    %c0_19 = arith.constant 0 : index
    %20 = vector.load %arg7[%c0_18, %c0_19] : memref<128x128xbf16, #tpu.memory_space<vmem>>, vector<128x128xbf16>
    %cst_20 = arith.constant dense<0.000000e+00> : vector<128x128xf32>
    %21 = tpu.matmul %14, %20, %cst_20 {dimension_numbers = #tpu.dot_dimension_numbers<[1], [0], [0], [1], [0, 0, 1, 1], [], []>} : vector<128x128xbf16>, vector<128x128xbf16>, vector<128x128xf32> -> vector<128x128xf32>
    %22 = arith.addf %19, %21 : vector<128x128xf32>
    %c0_21 = arith.constant 0 : index
    %c0_22 = arith.constant 0 : index
    %23 = vector.load %arg11[%c0_21, %c0_22] : memref<1x128xf32, #tpu.memory_space<vmem>>, vector<1x128xf32>
    %24 = vector.broadcast %23 : vector<1x128xf32> to vector<128x128xf32>
    %25 = arith.addf %22, %24 : vector<128x128xf32>
    %cst_23 = arith.constant 0.000000e+00 : f32
    %26 = vector.broadcast %cst_23 : f32 to vector<128x128xf32>
    %27 = arith.maximumf %25, %26 : vector<128x128xf32>
    %28 = arith.truncf %27 : vector<128x128xf32> to vector<128x128xbf16>
    %c0_24 = arith.constant 0 : index
    %c0_25 = arith.constant 0 : index
    %29 = vector.load %arg3[%c0_24, %c0_25] : memref<16x128xbf16, #tpu.memory_space<vmem>>, vector<16x128xbf16>
    %cst_26 = arith.constant dense<0.000000e+00> : vector<16x128xf32>
    %30 = tpu.matmul %29, %28, %cst_26 {dimension_numbers = #tpu.dot_dimension_numbers<[1], [0], [0], [1], [0, 0, 1, 1], [], []>} : vector<16x128xbf16>, vector<128x128xbf16>, vector<16x128xf32> -> vector<16x128xf32>
    %31 = vector.extract_strided_slice %28 {offsets = [0, 0], sizes = [16, 128], strides = [1, 1]} : vector<128x128xbf16> to vector<16x128xbf16>
    %32 = arith.truncf %30 : vector<16x128xf32> to vector<16x128xbf16>
    %c0_27 = arith.constant 0 : index
    %c0_28 = arith.constant 0 : index
    %33 = vector.load %arg8[%c0_27, %c0_28] : memref<128x128xbf16, #tpu.memory_space<vmem>>, vector<128x128xbf16>
    %cst_29 = arith.constant dense<0.000000e+00> : vector<16x128xf32>
    %34 = tpu.matmul %32, %33, %cst_29 {dimension_numbers = #tpu.dot_dimension_numbers<[1], [0], [0], [1], [0, 0, 1, 1], [], []>} : vector<16x128xbf16>, vector<128x128xbf16>, vector<16x128xf32> -> vector<16x128xf32>
    %c0_30 = arith.constant 0 : index
    %c0_31 = arith.constant 0 : index
    %35 = vector.load %arg9[%c0_30, %c0_31] : memref<128x128xbf16, #tpu.memory_space<vmem>>, vector<128x128xbf16>
    %cst_32 = arith.constant dense<0.000000e+00> : vector<16x128xf32>
    %36 = tpu.matmul %31, %35, %cst_32 {dimension_numbers = #tpu.dot_dimension_numbers<[1], [0], [0], [1], [0, 0, 1, 1], [], []>} : vector<16x128xbf16>, vector<128x128xbf16>, vector<16x128xf32> -> vector<16x128xf32>
    %37 = arith.addf %34, %36 : vector<16x128xf32>
    %c0_33 = arith.constant 0 : index
    %c0_34 = arith.constant 0 : index
    %38 = vector.load %arg12[%c0_33, %c0_34] : memref<1x128xf32, #tpu.memory_space<vmem>>, vector<1x128xf32>
    %39 = vector.broadcast %38 : vector<1x128xf32> to vector<16x128xf32>
    %40 = arith.addf %37, %39 : vector<16x128xf32>
    %c0_35 = arith.constant 0 : index
    %c0_36 = arith.constant 0 : index
    %41 = vector.load %arg13[%c0_35, %c0_36] : memref<16x128xf32, #tpu.memory_space<vmem>>, vector<16x128xf32>
    tpu.vector_store %arg13[%c0_35, %c0_36], %40 {strides = array<i32>} : memref<16x128xf32, #tpu.memory_space<vmem>>, vector<16x128xf32>,
    return
  }
}

</mosaic_0001>

<llo_original>
// kernel: forward.1
$region0: #{forward.1}
  #allocation0 [shape = 'u32[]', space=smem, size = 0x4, offset = 0x4, fixed_abs, tag = 'smem constant byte address 0x4 - core index']
  #allocation1 [shape = 'u32[72,128]{1,0:T(1,128)}', space=vmem, size = 0x9000, scoped, tag = 'internal scratch']
  %s0 = inlined_call_operand.vmem [shape: bf16[128,128], index: 0, kind: input, shape index: {}]
  %s1 = inlined_call_operand.vmem [shape: bf16[128,128], index: 1, kind: input, shape index: {}]
  %s2 = inlined_call_operand.vmem [shape: bf16[128,128], index: 2, kind: input, shape index: {}]
  %s3 = inlined_call_operand.vmem [shape: bf16[16,128], index: 3, kind: input, shape index: {}]
  %s4 = inlined_call_operand.hbm [shape: bf16[128,128], index: 4, kind: input, shape index: {}]
  %s5 = inlined_call_operand.vmem [shape: bf16[128,128], index: 5, kind: input, shape index: {}]
  %s6 = inlined_call_operand.vmem [shape: bf16[128,128], index: 6, kind: input, shape index: {}]
  %s7 = inlined_call_operand.vmem [shape: bf16[128,128], index: 7, kind: input, shape index: {}]
  %s8 = inlined_call_operand.vmem [shape: bf16[128,128], index: 8, kind: input, shape index: {}]
  %s9 = inlined_call_operand.vmem [shape: bf16[128,128], index: 9, kind: input, shape index: {}]
  %s10 = inlined_call_operand.vmem [shape: f32[1,128], index: 10, kind: input, shape index: {}, may-alias: {10,11,12}]
  %s11 = inlined_call_operand.vmem [shape: f32[1,128], index: 11, kind: input, shape index: {}, may-alias: {10,11,12}]
  %s12 = inlined_call_operand.vmem [shape: f32[1,128], index: 12, kind: input, shape index: {}, may-alias: {10,11,12}]
  %s13 = inlined_call_operand.vmem [shape: f32[16,128], index: 13, kind: output, shape index: {}]
  %s14 = sld [smem:[#allocation0]]
  $region66: #{forward.1} parent=0
    _
  %s16 = ssub.s32 1, %s14
  %s17 = scalar_select 0, %s16, %s14
  $region1: #{forward.1} parent=0
    #allocation2 [shape = 'u8[32768]{0}', space=vmem, size = 0x8000, scoped, tag = 'input window, operand 4, single buffered']
    #allocation3 [shape = 's32[1]{0}', space=sflag, size = 0x4, scoped, tag = 'scoped memory for forward.1']
    %18 = vsyncpa [#allocation3], 0
    // Predicated region
    $region2: #{forward.1} parent=1 // pred_check
      _
    $region3: #{forward.1} parent=1 // pred_check_branch
      %20 = sbr.rel (0) target = $region5
    $region4: #{forward.1} parent=1 // pred_region
      _
    $region5: #{forward.1} parent=1 // pred_fallthru
      _
    // Predicated region
    $region6: #{forward.1} parent=1 // pred_check
      _
    $region7: #{forward.1} parent=1 // pred_check_branch
      %22 = sbr.rel (0) target = $region9
    $region8: #{forward.1} parent=1 // pred_region
      _
    $region9: #{forward.1} parent=1 // pred_fallthru
      _
    // Predicated region
    $region10: #{forward.1} parent=1 // pred_check
      _
    $region11: #{forward.1} parent=1 // pred_check_branch
      %24 = sbr.rel (0) target = $region13
    $region12: #{forward.1} parent=1 // pred_region
      _
    $region13: #{forward.1} parent=1 // pred_fallthru
      _
    // Predicated region
    $region14: #{forward.1} parent=1 // pred_check
      _
    $region15: #{forward.1} parent=1 // pred_check_branch
      %26 = sbr.rel (0) target = $region17
    $region16: #{forward.1} parent=1 // pred_region
      _
    $region17: #{forward.1} parent=1 // pred_fallthru
      _
    // Predicated region
    $region18: #{forward.1} parent=1 // pred_check
      _
    $region19: #{forward.1} parent=1 // pred_check_branch
      %28 = sbr.rel (0) target = $region21
    $region20: #{forward.1} parent=1 // pred_region
      %30 = vsyncadd [#allocation3], 0
      %s31 = sshll.u32 %s4, 4
      %s32 = int_to_ptr.hbm [resolvable:$true] %s31
      %s33 = sshll.u32 [#allocation2], 4
      %s34 = int_to_ptr.vmem [resolvable:$true] %s33
      %39 = dma.hbm_to_vmem [thread:$0]  %s32, 1024, %s34, [#allocation3], 64, 64, 4
    $region21: #{forward.1} parent=1 // pred_fallthru
      _
    // Predicated region
    $region22: #{forward.1} parent=1 // pred_check
      _
    $region23: #{forward.1} parent=1 // pred_check_branch
      %41 = sbr.rel (0) target = $region25
    $region24: #{forward.1} parent=1 // pred_region
      _
    $region25: #{forward.1} parent=1 // pred_fallthru
      _
    // Predicated region
    $region26: #{forward.1} parent=1 // pred_check
      _
    $region27: #{forward.1} parent=1 // pred_check_branch
      %43 = sbr.rel (0) target = $region29
    $region28: #{forward.1} parent=1 // pred_region
      _
    $region29: #{forward.1} parent=1 // pred_fallthru
      _
    // Predicated region
    $region30: #{forward.1} parent=1 // pred_check
      _
    $region31: #{forward.1} parent=1 // pred_check_branch
      %45 = sbr.rel (0) target = $region33
    $region32: #{forward.1} parent=1 // pred_region
      _
    $region33: #{forward.1} parent=1 // pred_fallthru
      _
    // Predicated region
    $region34: #{forward.1} parent=1 // pred_check
      _
    $region35: #{forward.1} parent=1 // pred_check_branch
      %47 = sbr.rel (0) target = $region37
    $region36: #{forward.1} parent=1 // pred_region
      _
    $region37: #{forward.1} parent=1 // pred_fallthru
      _
    // Predicated region
    $region38: #{forward.1} parent=1 // pred_check
      _
    $region39: #{forward.1} parent=1 // pred_check_branch
      %49 = sbr.rel (0) target = $region41
    $region40: #{forward.1} parent=1 // pred_region
      _
    $region41: #{forward.1} parent=1 // pred_fallthru
      _
    // Predicated region
    $region42: #{forward.1} parent=1 // pred_check
      _
    $region43: #{forward.1} parent=1 // pred_check_branch
      %51 = sbr.rel (0) target = $region45
    $region44: #{forward.1} parent=1 // pred_region
      _
    $region45: #{forward.1} parent=1 // pred_fallthru
      _
    // Predicated region
    $region46: #{forward.1} parent=1 // pred_check
      _
    $region47: #{forward.1} parent=1 // pred_check_branch
      %53 = sbr.rel (0) target = $region49
    $region48: #{forward.1} parent=1 // pred_region
      _
    $region49: #{forward.1} parent=1 // pred_fallthru
      _
    // Predicated region
    $region50: #{forward.1} parent=1 // pred_check
      _
    $region51: #{forward.1} parent=1 // pred_check_branch
      %55 = sbr.rel (0) target = $region53
    $region52: #{forward.1} parent=1 // pred_region
      _
    $region53: #{forward.1} parent=1 // pred_fallthru
      _
    // Predicated region
    $region54: #{forward.1} parent=1 // pred_check
      _
    $region55: #{forward.1} parent=1 // pred_check_branch
      %57 = sbr.rel (0) target = $region57
    $region56: #{forward.1} parent=1 // pred_region
      %59 = dma.done [#allocation3], 1024
    $region57: #{forward.1} parent=1 // pred_fallthru
      _
    %v60 = vld [vmem:[%s0] sm:$0xf]
    %v61 = vld [vmem:[%s0 + $0x4] sm:$0xf]
    %v62 = vld [vmem:[%s0 + $0x8] sm:$0xf]
    %v63 = vld [vmem:[%s0 + $0xc] sm:$0xf]
    %v64 = vld [vmem:[%s0 + $0x10] sm:$0xf]
    %v65 = vld [vmem:[%s0 + $0x14] sm:$0xf]
    %v66 = vld [vmem:[%s0 + $0x18] sm:$0xf]
    %v67 = vld [vmem:[%s0 + $0x1c] sm:$0xf]
    %v68 = vld [vmem:[%s0 + $0x20] sm:$0xf]
    %v69 = vld [vmem:[%s0 + $0x24] sm:$0xf]
    %v70 = vld [vmem:[%s0 + $0x28] sm:$0xf]
    %v71 = vld [vmem:[%s0 + $0x2c] sm:$0xf]
    %v72 = vld [vmem:[%s0 + $0x30] sm:$0xf]
    %v73 = vld [vmem:[%s0 + $0x34] sm:$0xf]
    %v74 = vld [vmem:[%s0 + $0x38] sm:$0xf]
    %v75 = vld [vmem:[%s0 + $0x3c] sm:$0xf]
    %v76 = vld [vmem:[%s1] sm:$0xf]
    %v77 = vld [vmem:[%s1 + $0x4] sm:$0xf]
    %v78 = vld [vmem:[%s1 + $0x8] sm:$0xf]
    %v79 = vld [vmem:[%s1 + $0xc] sm:$0xf]
    %v80 = vld [vmem:[%s1 + $0x10] sm:$0xf]
    %v81 = vld [vmem:[%s1 + $0x14] sm:$0xf]
    %v82 = vld [vmem:[%s1 + $0x18] sm:$0xf]
    %v83 = vld [vmem:[%s1 + $0x1c] sm:$0xf]
    %v84 = vld [vmem:[%s1 + $0x20] sm:$0xf]
    %v85 = vld [vmem:[%s1 + $0x24] sm:$0xf]
    %v86 = vld [vmem:[%s1 + $0x28] sm:$0xf]
    %v87 = vld [vmem:[%s1 + $0x2c] sm:$0xf]
    %v88 = vld [vmem:[%s1 + $0x30] sm:$0xf]
    %v89 = vld [vmem:[%s1 + $0x34] sm:$0xf]
    %v90 = vld [vmem:[%s1 + $0x38] sm:$0xf]
    %v91 = vld [vmem:[%s1 + $0x3c] sm:$0xf]
    %v108 = vunpack.c.l.b16 %v76
    %v109 = vunpack.c.l.b16 %v77
    %v110 = vunpack.c.l.b16 %v78
    %v111 = vunpack.c.l.b16 %v79
    %v112 = vunpack.c.l.b16 %v80
    %v113 = vunpack.c.l.b16 %v81
    %v114 = vunpack.c.l.b16 %v82
    %v115 = vunpack.c.l.b16 %v83
    %v116 = vunpack.c.l.b16 %v84
    %v117 = vunpack.c.l.b16 %v85
    %v118 = vunpack.c.l.b16 %v86
    %v119 = vunpack.c.l.b16 %v87
    %v120 = vunpack.c.l.b16 %v88
    %v121 = vunpack.c.l.b16 %v89
    %v122 = vunpack.c.l.b16 %v90
    %v123 = vunpack.c.l.b16 %v91
    %v124 = vpack.c.b16 %v109, %v108
    %v125 = vpack.c.b16 %v111, %v110
    %v126 = vpack.c.b16 %v113, %v112
    %v127 = vpack.c.b16 %v115, %v114
    %v128 = vpack.c.b16 %v117, %v116
    %v129 = vpack.c.b16 %v119, %v118
    %v130 = vpack.c.b16 %v121, %v120
    %v131 = vpack.c.b16 %v123, %v122
    %v156 = vunpack.c.l.b16 %v60
    %v157 = vunpack.c.l.b16 %v61
    %v158 = vunpack.c.l.b16 %v62
    %v159 = vunpack.c.l.b16 %v63
    %v160 = vunpack.c.l.b16 %v64
    %v161 = vunpack.c.l.b16 %v65
    %v162 = vunpack.c.l.b16 %v66
    %v163 = vunpack.c.l.b16 %v67
    %v164 = vunpack.c.l.b16 %v68
    %v165 = vunpack.c.l.b16 %v69
    %v166 = vunpack.c.l.b16 %v70
    %v167 = vunpack.c.l.b16 %v71
    %v168 = vunpack.c.l.b16 %v72
    %v169 = vunpack.c.l.b16 %v73
    %v170 = vunpack.c.l.b16 %v74
    %v171 = vunpack.c.l.b16 %v75
    %v172 = vpack.c.b16 %v157, %v156
    %v173 = vpack.c.b16 %v159, %v158
    %v174 = vpack.c.b16 %v161, %v160
    %v175 = vpack.c.b16 %v163, %v162
    %v176 = vpack.c.b16 %v165, %v164
    %v177 = vpack.c.b16 %v167, %v166
    %v178 = vpack.c.b16 %v169, %v168
    %v179 = vpack.c.b16 %v171, %v170
    %188 = vmatpush.bf16.msra.mxu0 %v179
    %189 = vmatpush.bf16.msra.mxu0 %v178
    %190 = vmatpush.bf16.msra.mxu0 %v177
    %191 = vmatpush.bf16.msra.mxu0 %v176
    %192 = vmatpush.bf16.msra.mxu0 %v175
    %193 = vmatpush.bf16.msra.mxu0 %v174
    %194 = vmatpush.bf16.msra.mxu0 %v173
    %195 = vmatpush.bf16.msra.mxu0 %v172
    %196 = vmatmul.bf16.gmra.mxu0 %v124
    %v197 = vpop.f32.mrf.mxu0
    %v198 = vadd.f32 0.0, %v197
    %v199 = vpop.f32.mrf.mxu0
    %v200 = vadd.f32 0.0, %v199
    %201 = vmatmul.bf16.gmra.mxu0 %v125
    %v202 = vpop.f32.mrf.mxu0
    %v203 = vadd.f32 0.0, %v202
    %v204 = vpop.f32.mrf.mxu0
    %v205 = vadd.f32 0.0, %v204
    %206 = vmatmul.bf16.gmra.mxu0 %v126
    %v207 = vpop.f32.mrf.mxu0
    %v208 = vadd.f32 0.0, %v207
    %v209 = vpop.f32.mrf.mxu0
    %v210 = vadd.f32 0.0, %v209
    %211 = vmatmul.bf16.gmra.mxu0 %v127
    %v212 = vpop.f32.mrf.mxu0
    %v213 = vadd.f32 0.0, %v212
    %v214 = vpop.f32.mrf.mxu0
    %v215 = vadd.f32 0.0, %v214
    %216 = vmatmul.bf16.gmra.mxu0 %v128
    %v217 = vpop.f32.mrf.mxu0
    %v218 = vadd.f32 0.0, %v217
    %v219 = vpop.f32.mrf.mxu0
    %v220 = vadd.f32 0.0, %v219
    %221 = vmatmul.bf16.gmra.mxu0 %v129
    %v222 = vpop.f32.mrf.mxu0
    %v223 = vadd.f32 0.0, %v222
    %v224 = vpop.f32.mrf.mxu0
    %v225 = vadd.f32 0.0, %v224
    %226 = vmatmul.bf16.gmra.mxu0 %v130
    %v227 = vpop.f32.mrf.mxu0
    %v228 = vadd.f32 0.0, %v227
    %v229 = vpop.f32.mrf.mxu0
    %v230 = vadd.f32 0.0, %v229
    %231 = vmatmul.bf16.gmra.mxu0 %v131
    %v232 = vpop.f32.mrf.mxu0
    %v233 = vadd.f32 0.0, %v232
    %v234 = vpop.f32.mrf.mxu0
    %v235 = vadd.f32 0.0, %v234
    %236 = vdwg.mxu0
    %v237 = vpack.c.bf16 %v200, %v198
    %v238 = vpack.c.bf16 %v205, %v203
    %v239 = vpack.c.bf16 %v210, %v208
    %v240 = vpack.c.bf16 %v215, %v213
    %v241 = vpack.c.bf16 %v220, %v218
    %v242 = vpack.c.bf16 %v225, %v223
    %v243 = vpack.c.bf16 %v230, %v228
    %v244 = vpack.c.bf16 %v235, %v233
    %v245 = vld [vmem:[#allocation2] sm:$0xf]
    %v246 = vld [vmem:[#allocation2 + $0x4] sm:$0xf]
    %v247 = vld [vmem:[#allocation2 + $0x8] sm:$0xf]
    %v248 = vld [vmem:[#allocation2 + $0xc] sm:$0xf]
    %v249 = vld [vmem:[#allocation2 + $0x10] sm:$0xf]
    %v250 = vld [vmem:[#allocation2 + $0x14] sm:$0xf]
    %v251 = vld [vmem:[#allocation2 + $0x18] sm:$0xf]
    %v252 = vld [vmem:[#allocation2 + $0x1c] sm:$0xf]
    %v253 = vld [vmem:[#allocation2 + $0x20] sm:$0xf]
    %v254 = vld [vmem:[#allocation2 + $0x24] sm:$0xf]
    %v255 = vld [vmem:[#allocation2 + $0x28] sm:$0xf]
    %v256 = vld [vmem:[#allocation2 + $0x2c] sm:$0xf]
    %v257 = vld [vmem:[#allocation2 + $0x30] sm:$0xf]
    %v258 = vld [vmem:[#allocation2 + $0x34] sm:$0xf]
    %v259 = vld [vmem:[#allocation2 + $0x38] sm:$0xf]
    %v260 = vld [vmem:[#allocation2 + $0x3c] sm:$0xf]
    %v261 = vld [vmem:[%s5] sm:$0xf]
    %v262 = vld [vmem:[%s5 + $0x4] sm:$0xf]
    %v263 = vld [vmem:[%s5 + $0x8] sm:$0xf]
    %v264 = vld [vmem:[%s5 + $0xc] sm:$0xf]
    %v265 = vld [vmem:[%s5 + $0x10] sm:$0xf]
    %v266 = vld [vmem:[%s5 + $0x14] sm:$0xf]
    %v267 = vld [vmem:[%s5 + $0x18] sm:$0xf]
    %v268 = vld [vmem:[%s5 + $0x1c] sm:$0xf]
    %v269 = vld [vmem:[%s5 + $0x20] sm:$0xf]
    %v270 = vld [vmem:[%s5 + $0x24] sm:$0xf]
    %v271 = vld [vmem:[%s5 + $0x28] sm:$0xf]
    %v272 = vld [vmem:[%s5 + $0x2c] sm:$0xf]
    %v273 = vld [vmem:[%s5 + $0x30] sm:$0xf]
    %v274 = vld [vmem:[%s5 + $0x34] sm:$0xf]
    %v275 = vld [vmem:[%s5 + $0x38] sm:$0xf]
    %v276 = vld [vmem:[%s5 + $0x3c] sm:$0xf]
    %v293 = vunpack.c.l.b16 %v261
    %v294 = vunpack.c.l.b16 %v262
    %v295 = vunpack.c.l.b16 %v263
    %v296 = vunpack.c.l.b16 %v264
    %v297 = vunpack.c.l.b16 %v265
    %v298 = vunpack.c.l.b16 %v266
    %v299 = vunpack.c.l.b16 %v267
    %v300 = vunpack.c.l.b16 %v268
    %v301 = vunpack.c.l.b16 %v269
    %v302 = vunpack.c.l.b16 %v270
    %v303 = vunpack.c.l.b16 %v271
    %v304 = vunpack.c.l.b16 %v272
    %v305 = vunpack.c.l.b16 %v273
    %v306 = vunpack.c.l.b16 %v274
    %v307 = vunpack.c.l.b16 %v275
    %v308 = vunpack.c.l.b16 %v276
    %v309 = vpack.c.b16 %v294, %v293
    %v310 = vpack.c.b16 %v296, %v295
    %v311 = vpack.c.b16 %v298, %v297
    %v312 = vpack.c.b16 %v300, %v299
    %v313 = vpack.c.b16 %v302, %v301
    %v314 = vpack.c.b16 %v304, %v303
    %v315 = vpack.c.b16 %v306, %v305
    %v316 = vpack.c.b16 %v308, %v307
    %325 = vmatpush.bf16.msra.mxu0 %v316
    %326 = vmatpush.bf16.msra.mxu0 %v315
    %327 = vmatpush.bf16.msra.mxu0 %v314
    %328 = vmatpush.bf16.msra.mxu0 %v313
    %329 = vmatpush.bf16.msra.mxu0 %v312
    %330 = vmatpush.bf16.msra.mxu0 %v311
    %331 = vmatpush.bf16.msra.mxu0 %v310
    %332 = vmatpush.bf16.msra.mxu0 %v309
    %333 = vmatmul.bf16.gmra.mxu0 %v172
    %v334 = vpop.f32.mrf.mxu0
    %v335 = vadd.f32 0.0, %v334
    %v336 = vpop.f32.mrf.mxu0
    %v337 = vadd.f32 0.0, %v336
    %338 = vmatmul.bf16.gmra.mxu0 %v173
    %v339 = vpop.f32.mrf.mxu0
    %v340 = vadd.f32 0.0, %v339
    %v341 = vpop.f32.mrf.mxu0
    %v342 = vadd.f32 0.0, %v341
    %343 = vmatmul.bf16.gmra.mxu0 %v174
    %v344 = vpop.f32.mrf.mxu0
    %v345 = vadd.f32 0.0, %v344
    %v346 = vpop.f32.mrf.mxu0
    %v347 = vadd.f32 0.0, %v346
    %348 = vmatmul.bf16.gmra.mxu0 %v175
    %v349 = vpop.f32.mrf.mxu0
    %v350 = vadd.f32 0.0, %v349
    %v351 = vpop.f32.mrf.mxu0
    %v352 = vadd.f32 0.0, %v351
    %353 = vmatmul.bf16.gmra.mxu0 %v176
    %v354 = vpop.f32.mrf.mxu0
    %v355 = vadd.f32 0.0, %v354
    %v356 = vpop.f32.mrf.mxu0
    %v357 = vadd.f32 0.0, %v356
    %358 = vmatmul.bf16.gmra.mxu0 %v177
    %v359 = vpop.f32.mrf.mxu0
    %v360 = vadd.f32 0.0, %v359
    %v361 = vpop.f32.mrf.mxu0
    %v362 = vadd.f32 0.0, %v361
    %363 = vmatmul.bf16.gmra.mxu0 %v178
    %v364 = vpop.f32.mrf.mxu0
    %v365 = vadd.f32 0.0, %v364
    %v366 = vpop.f32.mrf.mxu0
    %v367 = vadd.f32 0.0, %v366
    %368 = vmatmul.bf16.gmra.mxu0 %v179
    %v369 = vpop.f32.mrf.mxu0
    %v370 = vadd.f32 0.0, %v369
    %v371 = vpop.f32.mrf.mxu0
    %v372 = vadd.f32 0.0, %v371
    %373 = vdwg.mxu0
    %v390 = vunpack.c.l.b16 %v245
    %v391 = vunpack.c.l.b16 %v246
    %v392 = vunpack.c.l.b16 %v247
    %v393 = vunpack.c.l.b16 %v248
    %v394 = vunpack.c.l.b16 %v249
    %v395 = vunpack.c.l.b16 %v250
    %v396 = vunpack.c.l.b16 %v251
    %v397 = vunpack.c.l.b16 %v252
    %v398 = vunpack.c.l.b16 %v253
    %v399 = vunpack.c.l.b16 %v254
    %v400 = vunpack.c.l.b16 %v255
    %v401 = vunpack.c.l.b16 %v256
    %v402 = vunpack.c.l.b16 %v257
    %v403 = vunpack.c.l.b16 %v258
    %v404 = vunpack.c.l.b16 %v259
    %v405 = vunpack.c.l.b16 %v260
    %v406 = vpack.c.b16 %v391, %v390
    %v407 = vpack.c.b16 %v393, %v392
    %v408 = vpack.c.b16 %v395, %v394
    %v409 = vpack.c.b16 %v397, %v396
    %v410 = vpack.c.b16 %v399, %v398
    %v411 = vpack.c.b16 %v401, %v400
    %v412 = vpack.c.b16 %v403, %v402
    %v413 = vpack.c.b16 %v405, %v404
    %422 = vmatpush.bf16.msra.mxu0 %v413
    %423 = vmatpush.bf16.msra.mxu0 %v412
    %424 = vmatpush.bf16.msra.mxu0 %v411
    %425 = vmatpush.bf16.msra.mxu0 %v410
    %426 = vmatpush.bf16.msra.mxu0 %v409
    %427 = vmatpush.bf16.msra.mxu0 %v408
    %428 = vmatpush.bf16.msra.mxu0 %v407
    %429 = vmatpush.bf16.msra.mxu0 %v406
    %430 = vmatmul.bf16.gmra.mxu0 %v237
    %v431 = vpop.f32.mrf.mxu0
    %v432 = vadd.f32 %v335, %v431
    %v433 = vpop.f32.mrf.mxu0
    %v434 = vadd.f32 %v337, %v433
    %435 = vmatmul.bf16.gmra.mxu0 %v238
    %v436 = vpop.f32.mrf.mxu0
    %v437 = vadd.f32 %v340, %v436
    %v438 = vpop.f32.mrf.mxu0
    %v439 = vadd.f32 %v342, %v438
    %440 = vmatmul.bf16.gmra.mxu0 %v239
    %v441 = vpop.f32.mrf.mxu0
    %v442 = vadd.f32 %v345, %v441
    %v443 = vpop.f32.mrf.mxu0
    %v444 = vadd.f32 %v347, %v443
    %445 = vmatmul.bf16.gmra.mxu0 %v240
    %v446 = vpop.f32.mrf.mxu0
    %v447 = vadd.f32 %v350, %v446
    %v448 = vpop.f32.mrf.mxu0
    %v449 = vadd.f32 %v352, %v448
    %450 = vmatmul.bf16.gmra.mxu0 %v241
    %v451 = vpop.f32.mrf.mxu0
    %v452 = vadd.f32 %v355, %v451
    %v453 = vpop.f32.mrf.mxu0
    %v454 = vadd.f32 %v357, %v453
    %455 = vmatmul.bf16.gmra.mxu0 %v242
    %v456 = vpop.f32.mrf.mxu0
    %v457 = vadd.f32 %v360, %v456
    %v458 = vpop.f32.mrf.mxu0
    %v459 = vadd.f32 %v362, %v458
    %460 = vmatmul.bf16.gmra.mxu0 %v243
    %v461 = vpop.f32.mrf.mxu0
    %v462 = vadd.f32 %v365, %v461
    %v463 = vpop.f32.mrf.mxu0
    %v464 = vadd.f32 %v367, %v463
    %465 = vmatmul.bf16.gmra.mxu0 %v244
    %v466 = vpop.f32.mrf.mxu0
    %v467 = vadd.f32 %v370, %v466
    %v468 = vpop.f32.mrf.mxu0
    %v469 = vadd.f32 %v372, %v468
    %470 = vdwg.mxu0
    %v471 = vld [vmem:[%s10] sm:$0x1]
    %v473 = vperm.slane %v471, 0
    %v475 = vadd.f32 %v432, %v473
    %v476 = vadd.f32 %v434, %v473
    %v477 = vadd.f32 %v437, %v473
    %v478 = vadd.f32 %v439, %v473
    %v479 = vadd.f32 %v442, %v473
    %v480 = vadd.f32 %v444, %v473
    %v481 = vadd.f32 %v447, %v473
    %v482 = vadd.f32 %v449, %v473
    %v483 = vadd.f32 %v452, %v473
    %v484 = vadd.f32 %v454, %v473
    %v485 = vadd.f32 %v457, %v473
    %v486 = vadd.f32 %v459, %v473
    %v487 = vadd.f32 %v462, %v473
    %v488 = vadd.f32 %v464, %v473
    %v489 = vadd.f32 %v467, %v473
    %v490 = vadd.f32 %v469, %v473
    %v491 = vmax.f32 %v475, 0.0
    %v492 = vmax.f32 %v476, 0.0
    %v493 = vmax.f32 %v477, 0.0
    %v494 = vmax.f32 %v478, 0.0
    %v495 = vmax.f32 %v479, 0.0
    %v496 = vmax.f32 %v480, 0.0
    %v497 = vmax.f32 %v481, 0.0
    %v498 = vmax.f32 %v482, 0.0
    %v499 = vmax.f32 %v483, 0.0
    %v500 = vmax.f32 %v484, 0.0
    %v501 = vmax.f32 %v485, 0.0
    %v502 = vmax.f32 %v486, 0.0
    %v503 = vmax.f32 %v487, 0.0
    %v504 = vmax.f32 %v488, 0.0
    %v505 = vmax.f32 %v489, 0.0
    %v506 = vmax.f32 %v490, 0.0
    %v507 = vpack.c.bf16 %v492, %v491
    %v508 = vpack.c.bf16 %v494, %v493
    %v509 = vpack.c.bf16 %v496, %v495
    %v510 = vpack.c.bf16 %v498, %v497
    %v511 = vpack.c.bf16 %v500, %v499
    %v512 = vpack.c.bf16 %v502, %v501
    %v513 = vpack.c.bf16 %v504, %v503
    %v514 = vpack.c.bf16 %v506, %v505
    %v515 = vld [vmem:[%s2] sm:$0xf]
    %v516 = vld [vmem:[%s2 + $0x4] sm:$0xf]
    %v517 = vld [vmem:[%s2 + $0x8] sm:$0xf]
    %v518 = vld [vmem:[%s2 + $0xc] sm:$0xf]
    %v519 = vld [vmem:[%s2 + $0x10] sm:$0xf]
    %v520 = vld [vmem:[%s2 + $0x14] sm:$0xf]
    %v521 = vld [vmem:[%s2 + $0x18] sm:$0xf]
    %v522 = vld [vmem:[%s2 + $0x1c] sm:$0xf]
    %v523 = vld [vmem:[%s2 + $0x20] sm:$0xf]
    %v524 = vld [vmem:[%s2 + $0x24] sm:$0xf]
    %v525 = vld [vmem:[%s2 + $0x28] sm:$0xf]
    %v526 = vld [vmem:[%s2 + $0x2c] sm:$0xf]
    %v527 = vld [vmem:[%s2 + $0x30] sm:$0xf]
    %v528 = vld [vmem:[%s2 + $0x34] sm:$0xf]
    %v529 = vld [vmem:[%s2 + $0x38] sm:$0xf]
    %v530 = vld [vmem:[%s2 + $0x3c] sm:$0xf]
    %v547 = vunpack.c.l.b16 %v515
    %v548 = vunpack.c.l.b16 %v516
    %v549 = vunpack.c.l.b16 %v517
    %v550 = vunpack.c.l.b16 %v518
    %v551 = vunpack.c.l.b16 %v519
    %v552 = vunpack.c.l.b16 %v520
    %v553 = vunpack.c.l.b16 %v521
    %v554 = vunpack.c.l.b16 %v522
    %v555 = vunpack.c.l.b16 %v523
    %v556 = vunpack.c.l.b16 %v524
    %v557 = vunpack.c.l.b16 %v525
    %v558 = vunpack.c.l.b16 %v526
    %v559 = vunpack.c.l.b16 %v527
    %v560 = vunpack.c.l.b16 %v528
    %v561 = vunpack.c.l.b16 %v529
    %v562 = vunpack.c.l.b16 %v530
    %v563 = vpack.c.b16 %v548, %v547
    %v564 = vpack.c.b16 %v550, %v549
    %v565 = vpack.c.b16 %v552, %v551
    %v566 = vpack.c.b16 %v554, %v553
    %v567 = vpack.c.b16 %v556, %v555
    %v568 = vpack.c.b16 %v558, %v557
    %v569 = vpack.c.b16 %v560, %v559
    %v570 = vpack.c.b16 %v562, %v561
    %579 = vmatpush.bf16.msra.mxu0 %v514
    %580 = vmatpush.bf16.msra.mxu0 %v513
    %581 = vmatpush.bf16.msra.mxu0 %v512
    %582 = vmatpush.bf16.msra.mxu0 %v511
    %583 = vmatpush.bf16.msra.mxu0 %v510
    %584 = vmatpush.bf16.msra.mxu0 %v509
    %585 = vmatpush.bf16.msra.mxu0 %v508
    %586 = vmatpush.bf16.msra.mxu0 %v507
    %587 = vmatmul.bf16.gmra.mxu0 %v563
    %v588 = vpop.f32.mrf.mxu0
    %v589 = vadd.f32 0.0, %v588
    %v590 = vpop.f32.mrf.mxu0
    %v591 = vadd.f32 0.0, %v590
    %592 = vmatmul.bf16.gmra.mxu0 %v564
    %v593 = vpop.f32.mrf.mxu0
    %v594 = vadd.f32 0.0, %v593
    %v595 = vpop.f32.mrf.mxu0
    %v596 = vadd.f32 0.0, %v595
    %597 = vmatmul.bf16.gmra.mxu0 %v565
    %v598 = vpop.f32.mrf.mxu0
    %v599 = vadd.f32 0.0, %v598
    %v600 = vpop.f32.mrf.mxu0
    %v601 = vadd.f32 0.0, %v600
    %602 = vmatmul.bf16.gmra.mxu0 %v566
    %v603 = vpop.f32.mrf.mxu0
    %v604 = vadd.f32 0.0, %v603
    %v605 = vpop.f32.mrf.mxu0
    %v606 = vadd.f32 0.0, %v605
    %607 = vmatmul.bf16.gmra.mxu0 %v567
    %v608 = vpop.f32.mrf.mxu0
    %v609 = vadd.f32 0.0, %v608
    %v610 = vpop.f32.mrf.mxu0
    %v611 = vadd.f32 0.0, %v610
    %612 = vmatmul.bf16.gmra.mxu0 %v568
    %v613 = vpop.f32.mrf.mxu0
    %v614 = vadd.f32 0.0, %v613
    %v615 = vpop.f32.mrf.mxu0
    %v616 = vadd.f32 0.0, %v615
    %617 = vmatmul.bf16.gmra.mxu0 %v569
    %v618 = vpop.f32.mrf.mxu0
    %v619 = vadd.f32 0.0, %v618
    %v620 = vpop.f32.mrf.mxu0
    %v621 = vadd.f32 0.0, %v620
    %622 = vmatmul.bf16.gmra.mxu0 %v570
    %v623 = vpop.f32.mrf.mxu0
    %v624 = vadd.f32 0.0, %v623
    %v625 = vpop.f32.mrf.mxu0
    %v626 = vadd.f32 0.0, %v625
    %627 = vdwg.mxu0
    %v628 = vpack.c.bf16 %v591, %v589
    %v629 = vpack.c.bf16 %v596, %v594
    %v630 = vpack.c.bf16 %v601, %v599
    %v631 = vpack.c.bf16 %v606, %v604
    %v632 = vpack.c.bf16 %v611, %v609
    %v633 = vpack.c.bf16 %v616, %v614
    %v634 = vpack.c.bf16 %v621, %v619
    %v635 = vpack.c.bf16 %v626, %v624
    %v636 = vld [vmem:[%s6] sm:$0xf]
    %v637 = vld [vmem:[%s6 + $0x4] sm:$0xf]
    %v638 = vld [vmem:[%s6 + $0x8] sm:$0xf]
    %v639 = vld [vmem:[%s6 + $0xc] sm:$0xf]
    %v640 = vld [vmem:[%s6 + $0x10] sm:$0xf]
    %v641 = vld [vmem:[%s6 + $0x14] sm:$0xf]
    %v642 = vld [vmem:[%s6 + $0x18] sm:$0xf]
    %v643 = vld [vmem:[%s6 + $0x1c] sm:$0xf]
    %v644 = vld [vmem:[%s6 + $0x20] sm:$0xf]
    %v645 = vld [vmem:[%s6 + $0x24] sm:$0xf]
    %v646 = vld [vmem:[%s6 + $0x28] sm:$0xf]
    %v647 = vld [vmem:[%s6 + $0x2c] sm:$0xf]
    %v648 = vld [vmem:[%s6 + $0x30] sm:$0xf]
    %v649 = vld [vmem:[%s6 + $0x34] sm:$0xf]
    %v650 = vld [vmem:[%s6 + $0x38] sm:$0xf]
    %v651 = vld [vmem:[%s6 + $0x3c] sm:$0xf]
    %v652 = vld [vmem:[%s7] sm:$0xf]
    %v653 = vld [vmem:[%s7 + $0x4] sm:$0xf]
    %v654 = vld [vmem:[%s7 + $0x8] sm:$0xf]
    %v655 = vld [vmem:[%s7 + $0xc] sm:$0xf]
    %v656 = vld [vmem:[%s7 + $0x10] sm:$0xf]
    %v657 = vld [vmem:[%s7 + $0x14] sm:$0xf]
    %v658 = vld [vmem:[%s7 + $0x18] sm:$0xf]
    %v659 = vld [vmem:[%s7 + $0x1c] sm:$0xf]
    %v660 = vld [vmem:[%s7 + $0x20] sm:$0xf]
    %v661 = vld [vmem:[%s7 + $0x24] sm:$0xf]
    %v662 = vld [vmem:[%s7 + $0x28] sm:$0xf]
    %v663 = vld [vmem:[%s7 + $0x2c] sm:$0xf]
    %v664 = vld [vmem:[%s7 + $0x30] sm:$0xf]
    %v665 = vld [vmem:[%s7 + $0x34] sm:$0xf]
    %v666 = vld [vmem:[%s7 + $0x38] sm:$0xf]
    %v667 = vld [vmem:[%s7 + $0x3c] sm:$0xf]
    %v684 = vunpack.c.l.b16 %v652
    %v685 = vunpack.c.l.b16 %v653
    %v686 = vunpack.c.l.b16 %v654
    %v687 = vunpack.c.l.b16 %v655
    %v688 = vunpack.c.l.b16 %v656
    %v689 = vunpack.c.l.b16 %v657
    %v690 = vunpack.c.l.b16 %v658
    %v691 = vunpack.c.l.b16 %v659
    %v692 = vunpack.c.l.b16 %v660
    %v693 = vunpack.c.l.b16 %v661
    %v694 = vunpack.c.l.b16 %v662
    %v695 = vunpack.c.l.b16 %v663
    %v696 = vunpack.c.l.b16 %v664
    %v697 = vunpack.c.l.b16 %v665
    %v698 = vunpack.c.l.b16 %v666
    %v699 = vunpack.c.l.b16 %v667
    %v700 = vpack.c.b16 %v685, %v684
    %v701 = vpack.c.b16 %v687, %v686
    %v702 = vpack.c.b16 %v689, %v688
    %v703 = vpack.c.b16 %v691, %v690
    %v704 = vpack.c.b16 %v693, %v692
    %v705 = vpack.c.b16 %v695, %v694
    %v706 = vpack.c.b16 %v697, %v696
    %v707 = vpack.c.b16 %v699, %v698
    %716 = vmatpush.bf16.msra.mxu0 %v707
    %717 = vmatpush.bf16.msra.mxu0 %v706
    %718 = vmatpush.bf16.msra.mxu0 %v705
    %719 = vmatpush.bf16.msra.mxu0 %v704
    %720 = vmatpush.bf16.msra.mxu0 %v703
    %721 = vmatpush.bf16.msra.mxu0 %v702
    %722 = vmatpush.bf16.msra.mxu0 %v701
    %723 = vmatpush.bf16.msra.mxu0 %v700
    %724 = vmatmul.bf16.gmra.mxu0 %v507
    %v725 = vpop.f32.mrf.mxu0
    %v726 = vadd.f32 0.0, %v725
    %v727 = vpop.f32.mrf.mxu0
    %v728 = vadd.f32 0.0, %v727
    %729 = vmatmul.bf16.gmra.mxu0 %v508
    %v730 = vpop.f32.mrf.mxu0
    %v731 = vadd.f32 0.0, %v730
    %v732 = vpop.f32.mrf.mxu0
    %v733 = vadd.f32 0.0, %v732
    %734 = vmatmul.bf16.gmra.mxu0 %v509
    %v735 = vpop.f32.mrf.mxu0
    %v736 = vadd.f32 0.0, %v735
    %v737 = vpop.f32.mrf.mxu0
    %v738 = vadd.f32 0.0, %v737
    %739 = vmatmul.bf16.gmra.mxu0 %v510
    %v740 = vpop.f32.mrf.mxu0
    %v741 = vadd.f32 0.0, %v740
    %v742 = vpop.f32.mrf.mxu0
    %v743 = vadd.f32 0.0, %v742
    %744 = vmatmul.bf16.gmra.mxu0 %v511
    %v745 = vpop.f32.mrf.mxu0
    %v746 = vadd.f32 0.0, %v745
    %v747 = vpop.f32.mrf.mxu0
    %v748 = vadd.f32 0.0, %v747
    %749 = vmatmul.bf16.gmra.mxu0 %v512
    %v750 = vpop.f32.mrf.mxu0
    %v751 = vadd.f32 0.0, %v750
    %v752 = vpop.f32.mrf.mxu0
    %v753 = vadd.f32 0.0, %v752
    %754 = vmatmul.bf16.gmra.mxu0 %v513
    %v755 = vpop.f32.mrf.mxu0
    %v756 = vadd.f32 0.0, %v755
    %v757 = vpop.f32.mrf.mxu0
    %v758 = vadd.f32 0.0, %v757
    %759 = vmatmul.bf16.gmra.mxu0 %v514
    %v760 = vpop.f32.mrf.mxu0
    %v761 = vadd.f32 0.0, %v760
    %v762 = vpop.f32.mrf.mxu0
    %v763 = vadd.f32 0.0, %v762
    %764 = vdwg.mxu0
    %v781 = vunpack.c.l.b16 %v636
    %v782 = vunpack.c.l.b16 %v637
    %v783 = vunpack.c.l.b16 %v638
    %v784 = vunpack.c.l.b16 %v639
    %v785 = vunpack.c.l.b16 %v640
    %v786 = vunpack.c.l.b16 %v641
    %v787 = vunpack.c.l.b16 %v642
    %v788 = vunpack.c.l.b16 %v643
    %v789 = vunpack.c.l.b16 %v644
    %v790 = vunpack.c.l.b16 %v645
    %v791 = vunpack.c.l.b16 %v646
    %v792 = vunpack.c.l.b16 %v647
    %v793 = vunpack.c.l.b16 %v648
    %v794 = vunpack.c.l.b16 %v649
    %v795 = vunpack.c.l.b16 %v650
    %v796 = vunpack.c.l.b16 %v651
    %v797 = vpack.c.b16 %v782, %v781
    %v798 = vpack.c.b16 %v784, %v783
    %v799 = vpack.c.b16 %v786, %v785
    %v800 = vpack.c.b16 %v788, %v787
    %v801 = vpack.c.b16 %v790, %v789
    %v802 = vpack.c.b16 %v792, %v791
    %v803 = vpack.c.b16 %v794, %v793
    %v804 = vpack.c.b16 %v796, %v795
    %813 = vmatpush.bf16.msra.mxu0 %v804
    %814 = vmatpush.bf16.msra.mxu0 %v803
    %815 = vmatpush.bf16.msra.mxu0 %v802
    %816 = vmatpush.bf16.msra.mxu0 %v801
    %817 = vmatpush.bf16.msra.mxu0 %v800
    %818 = vmatpush.bf16.msra.mxu0 %v799
    %819 = vmatpush.bf16.msra.mxu0 %v798
    %820 = vmatpush.bf16.msra.mxu0 %v797
    %821 = vmatmul.bf16.gmra.mxu0 %v628
    %v822 = vpop.f32.mrf.mxu0
    %v823 = vadd.f32 %v726, %v822
    %v824 = vpop.f32.mrf.mxu0
    %v825 = vadd.f32 %v728, %v824
    %826 = vmatmul.bf16.gmra.mxu0 %v629
    %v827 = vpop.f32.mrf.mxu0
    %v828 = vadd.f32 %v731, %v827
    %v829 = vpop.f32.mrf.mxu0
    %v830 = vadd.f32 %v733, %v829
    %831 = vmatmul.bf16.gmra.mxu0 %v630
    %v832 = vpop.f32.mrf.mxu0
    %v833 = vadd.f32 %v736, %v832
    %v834 = vpop.f32.mrf.mxu0
    %v835 = vadd.f32 %v738, %v834
    %836 = vmatmul.bf16.gmra.mxu0 %v631
    %v837 = vpop.f32.mrf.mxu0
    %v838 = vadd.f32 %v741, %v837
    %v839 = vpop.f32.mrf.mxu0
    %v840 = vadd.f32 %v743, %v839
    %841 = vmatmul.bf16.gmra.mxu0 %v632
    %v842 = vpop.f32.mrf.mxu0
    %v843 = vadd.f32 %v746, %v842
    %v844 = vpop.f32.mrf.mxu0
    %v845 = vadd.f32 %v748, %v844
    %846 = vmatmul.bf16.gmra.mxu0 %v633
    %v847 = vpop.f32.mrf.mxu0
    %v848 = vadd.f32 %v751, %v847
    %v849 = vpop.f32.mrf.mxu0
    %v850 = vadd.f32 %v753, %v849
    %851 = vmatmul.bf16.gmra.mxu0 %v634
    %v852 = vpop.f32.mrf.mxu0
    %v853 = vadd.f32 %v756, %v852
    %v854 = vpop.f32.mrf.mxu0
    %v855 = vadd.f32 %v758, %v854
    %856 = vmatmul.bf16.gmra.mxu0 %v635
    %v857 = vpop.f32.mrf.mxu0
    %v858 = vadd.f32 %v761, %v857
    %v859 = vpop.f32.mrf.mxu0
    %v860 = vadd.f32 %v763, %v859
    %861 = vdwg.mxu0
    %v862 = vld [vmem:[%s11] sm:$0x1]
    %v864 = vperm.slane %v862, 0
    %v866 = vadd.f32 %v823, %v864
    %v867 = vadd.f32 %v825, %v864
    %v868 = vadd.f32 %v828, %v864
    %v869 = vadd.f32 %v830, %v864
    %v870 = vadd.f32 %v833, %v864
    %v871 = vadd.f32 %v835, %v864
    %v872 = vadd.f32 %v838, %v864
    %v873 = vadd.f32 %v840, %v864
    %v874 = vadd.f32 %v843, %v864
    %v875 = vadd.f32 %v845, %v864
    %v876 = vadd.f32 %v848, %v864
    %v877 = vadd.f32 %v850, %v864
    %v878 = vadd.f32 %v853, %v864
    %v879 = vadd.f32 %v855, %v864
    %v880 = vadd.f32 %v858, %v864
    %v881 = vadd.f32 %v860, %v864
    %v882 = vmax.f32 %v866, 0.0
    %v883 = vmax.f32 %v867, 0.0
    %v884 = vmax.f32 %v868, 0.0
    %v885 = vmax.f32 %v869, 0.0
    %v886 = vmax.f32 %v870, 0.0
    %v887 = vmax.f32 %v871, 0.0
    %v888 = vmax.f32 %v872, 0.0
    %v889 = vmax.f32 %v873, 0.0
    %v890 = vmax.f32 %v874, 0.0
    %v891 = vmax.f32 %v875, 0.0
    %v892 = vmax.f32 %v876, 0.0
    %v893 = vmax.f32 %v877, 0.0
    %v894 = vmax.f32 %v878, 0.0
    %v895 = vmax.f32 %v879, 0.0
    %v896 = vmax.f32 %v880, 0.0
    %v897 = vmax.f32 %v881, 0.0
    %v898 = vpack.c.bf16 %v882, %v882
    %v899 = vpack.c.bf16 %v883, %v883
    %v900 = vpack.c.bf16 %v884, %v884
    %v901 = vpack.c.bf16 %v885, %v885
    %v902 = vpack.c.bf16 %v886, %v886
    %v903 = vpack.c.bf16 %v887, %v887
    %v904 = vpack.c.bf16 %v888, %v888
    %v905 = vpack.c.bf16 %v889, %v889
    %v906 = vpack.c.bf16 %v890, %v890
    %v907 = vpack.c.bf16 %v891, %v891
    %v908 = vpack.c.bf16 %v892, %v892
    %v909 = vpack.c.bf16 %v893, %v893
    %v910 = vpack.c.bf16 %v894, %v894
    %v911 = vpack.c.bf16 %v895, %v895
    %v912 = vpack.c.bf16 %v896, %v896
    %v913 = vpack.c.bf16 %v897, %v897
    %v914 = vld [vmem:[%s3] sm:$0xf]
    %v915 = vld [vmem:[%s3 + $0x4] sm:$0xf]
    %v918 = vunpack.c.l.b16 %v914
    %v919 = vunpack.c.l.b16 %v915
    %v920 = vpack.c.b16 %v919, %v918
    %v938 = vunpack.c.l.b16 %v898
    %v939 = vunpack.c.l.b16 %v899
    %v940 = vunpack.c.l.b16 %v900
    %v941 = vunpack.c.l.b16 %v901
    %v942 = vunpack.c.l.b16 %v902
    %v943 = vunpack.c.l.b16 %v903
    %v944 = vunpack.c.l.b16 %v904
    %v945 = vunpack.c.l.b16 %v905
    %v946 = vunpack.c.l.b16 %v906
    %v947 = vunpack.c.l.b16 %v907
    %v948 = vunpack.c.l.b16 %v908
    %v949 = vunpack.c.l.b16 %v909
    %v950 = vunpack.c.l.b16 %v910
    %v951 = vunpack.c.l.b16 %v911
    %v952 = vunpack.c.l.b16 %v912
    %v953 = vunpack.c.l.b16 %v913
    %v954 = vpack.c.b16 %v939, %v938
    %v955 = vpack.c.b16 %v941, %v940
    %v956 = vpack.c.b16 %v943, %v942
    %v957 = vpack.c.b16 %v945, %v944
    %v958 = vpack.c.b16 %v947, %v946
    %v959 = vpack.c.b16 %v949, %v948
    %v960 = vpack.c.b16 %v951, %v950
    %v961 = vpack.c.b16 %v953, %v952
    %970 = vmatpush.bf16.msra.mxu0 %v961
    %971 = vmatpush.bf16.msra.mxu0 %v960
    %972 = vmatpush.bf16.msra.mxu0 %v959
    %973 = vmatpush.bf16.msra.mxu0 %v958
    %974 = vmatpush.bf16.msra.mxu0 %v957
    %975 = vmatpush.bf16.msra.mxu0 %v956
    %976 = vmatpush.bf16.msra.mxu0 %v955
    %977 = vmatpush.bf16.msra.mxu0 %v954
    %978 = vmatmul.bf16.gmra.mxu0 %v920
    %v979 = vpop.f32.mrf.mxu0
    %v980 = vadd.f32 0.0, %v979
    %v981 = vpop.f32.mrf.mxu0
    %v982 = vadd.f32 0.0, %v981
    %983 = vdwg.mxu0
    %v984 = vpack.c.bf16 %v982, %v980
    %v985 = vld [vmem:[%s8] sm:$0xf]
    %v986 = vld [vmem:[%s8 + $0x4] sm:$0xf]
    %v987 = vld [vmem:[%s8 + $0x8] sm:$0xf]
    %v988 = vld [vmem:[%s8 + $0xc] sm:$0xf]
    %v989 = vld [vmem:[%s8 + $0x10] sm:$0xf]
    %v990 = vld [vmem:[%s8 + $0x14] sm:$0xf]
    %v991 = vld [vmem:[%s8 + $0x18] sm:$0xf]
    %v992 = vld [vmem:[%s8 + $0x1c] sm:$0xf]
    %v993 = vld [vmem:[%s8 + $0x20] sm:$0xf]
    %v994 = vld [vmem:[%s8 + $0x24] sm:$0xf]
    %v995 = vld [vmem:[%s8 + $0x28] sm:$0xf]
    %v996 = vld [vmem:[%s8 + $0x2c] sm:$0xf]
    %v997 = vld [vmem:[%s8 + $0x30] sm:$0xf]
    %v998 = vld [vmem:[%s8 + $0x34] sm:$0xf]
    %v999 = vld [vmem:[%s8 + $0x38] sm:$0xf]
    %v1000 = vld [vmem:[%s8 + $0x3c] sm:$0xf]
    %v1001 = vld [vmem:[%s9] sm:$0xf]
    %v1002 = vld [vmem:[%s9 + $0x4] sm:$0xf]
    %v1003 = vld [vmem:[%s9 + $0x8] sm:$0xf]
    %v1004 = vld [vmem:[%s9 + $0xc] sm:$0xf]
    %v1005 = vld [vmem:[%s9 + $0x10] sm:$0xf]
    %v1006 = vld [vmem:[%s9 + $0x14] sm:$0xf]
    %v1007 = vld [vmem:[%s9 + $0x18] sm:$0xf]
    %v1008 = vld [vmem:[%s9 + $0x1c] sm:$0xf]
    %v1009 = vld [vmem:[%s9 + $0x20] sm:$0xf]
    %v1010 = vld [vmem:[%s9 + $0x24] sm:$0xf]
    %v1011 = vld [vmem:[%s9 + $0x28] sm:$0xf]
    %v1012 = vld [vmem:[%s9 + $0x2c] sm:$0xf]
    %v1013 = vld [vmem:[%s9 + $0x30] sm:$0xf]
    %v1014 = vld [vmem:[%s9 + $0x34] sm:$0xf]
    %v1015 = vld [vmem:[%s9 + $0x38] sm:$0xf]
    %v1016 = vld [vmem:[%s9 + $0x3c] sm:$0xf]
    %v1033 = vunpack.c.l.b16 %v1001
    %v1034 = vunpack.c.l.b16 %v1002
    %v1035 = vunpack.c.l.b16 %v1003
    %v1036 = vunpack.c.l.b16 %v1004
    %v1037 = vunpack.c.l.b16 %v1005
    %v1038 = vunpack.c.l.b16 %v1006
    %v1039 = vunpack.c.l.b16 %v1007
    %v1040 = vunpack.c.l.b16 %v1008
    %v1041 = vunpack.c.l.b16 %v1009
    %v1042 = vunpack.c.l.b16 %v1010
    %v1043 = vunpack.c.l.b16 %v1011
    %v1044 = vunpack.c.l.b16 %v1012
    %v1045 = vunpack.c.l.b16 %v1013
    %v1046 = vunpack.c.l.b16 %v1014
    %v1047 = vunpack.c.l.b16 %v1015
    %v1048 = vunpack.c.l.b16 %v1016
    %v1049 = vpack.c.b16 %v1034, %v1033
    %v1050 = vpack.c.b16 %v1036, %v1035
    %v1051 = vpack.c.b16 %v1038, %v1037
    %v1052 = vpack.c.b16 %v1040, %v1039
    %v1053 = vpack.c.b16 %v1042, %v1041
    %v1054 = vpack.c.b16 %v1044, %v1043
    %v1055 = vpack.c.b16 %v1046, %v1045
    %v1056 = vpack.c.b16 %v1048, %v1047
    %1065 = vmatpush.bf16.msra.mxu0 %v1056
    %1066 = vmatpush.bf16.msra.mxu0 %v1055
    %1067 = vmatpush.bf16.msra.mxu0 %v1054
    %1068 = vmatpush.bf16.msra.mxu0 %v1053
    %1069 = vmatpush.bf16.msra.mxu0 %v1052
    %1070 = vmatpush.bf16.msra.mxu0 %v1051
    %1071 = vmatpush.bf16.msra.mxu0 %v1050
    %1072 = vmatpush.bf16.msra.mxu0 %v1049
    %1073 = vmatmul.bf16.gmra.mxu0 %v954
    %v1074 = vpop.f32.mrf.mxu0
    %v1075 = vadd.f32 0.0, %v1074
    %v1076 = vpop.f32.mrf.mxu0
    %v1077 = vadd.f32 0.0, %v1076
    %1078 = vdwg.mxu0
    %v1095 = vunpack.c.l.b16 %v985
    %v1096 = vunpack.c.l.b16 %v986
    %v1097 = vunpack.c.l.b16 %v987
    %v1098 = vunpack.c.l.b16 %v988
    %v1099 = vunpack.c.l.b16 %v989
    %v1100 = vunpack.c.l.b16 %v990
    %v1101 = vunpack.c.l.b16 %v991
    %v1102 = vunpack.c.l.b16 %v992
    %v1103 = vunpack.c.l.b16 %v993
    %v1104 = vunpack.c.l.b16 %v994
    %v1105 = vunpack.c.l.b16 %v995
    %v1106 = vunpack.c.l.b16 %v996
    %v1107 = vunpack.c.l.b16 %v997
    %v1108 = vunpack.c.l.b16 %v998
    %v1109 = vunpack.c.l.b16 %v999
    %v1110 = vunpack.c.l.b16 %v1000
    %v1111 = vpack.c.b16 %v1096, %v1095
    %v1112 = vpack.c.b16 %v1098, %v1097
    %v1113 = vpack.c.b16 %v1100, %v1099
    %v1114 = vpack.c.b16 %v1102, %v1101
    %v1115 = vpack.c.b16 %v1104, %v1103
    %v1116 = vpack.c.b16 %v1106, %v1105
    %v1117 = vpack.c.b16 %v1108, %v1107
    %v1118 = vpack.c.b16 %v1110, %v1109
    %1127 = vmatpush.bf16.msra.mxu0 %v1118
    %1128 = vmatpush.bf16.msra.mxu0 %v1117
    %1129 = vmatpush.bf16.msra.mxu0 %v1116
    %1130 = vmatpush.bf16.msra.mxu0 %v1115
    %1131 = vmatpush.bf16.msra.mxu0 %v1114
    %1132 = vmatpush.bf16.msra.mxu0 %v1113
    %1133 = vmatpush.bf16.msra.mxu0 %v1112
    %1134 = vmatpush.bf16.msra.mxu0 %v1111
    %1135 = vmatmul.bf16.gmra.mxu0 %v984
    %v1136 = vpop.f32.mrf.mxu0
    %v1137 = vadd.f32 %v1075, %v1136
    %v1138 = vpop.f32.mrf.mxu0
    %v1139 = vadd.f32 %v1077, %v1138
    %1140 = vdwg.mxu0
    %v1141 = vld [vmem:[%s12] sm:$0x1]
    %v1143 = vperm.slane %v1141, 0
    %v1145 = vadd.f32 %v1137, %v1143
    %v1146 = vadd.f32 %v1139, %v1143
    %1147 = vst [vmem:[%s13] sm:$0xff] %v1145
    %1148 = vst [vmem:[%s13 + $0x8] sm:$0xff] %v1146
    // Predicated region
    $region58: #{forward.1} parent=1 // pred_check
      _
    $region59: #{forward.1} parent=1 // pred_check_branch
      %1150 = sbr.rel (0) target = $region61
    $region60: #{forward.1} parent=1 // pred_region
      _
    $region61: #{forward.1} parent=1 // pred_fallthru
      _
    // Predicated region
    $region62: #{forward.1} parent=1 // pred_check
      _
    $region63: #{forward.1} parent=1 // pred_check_branch
      %1152 = sbr.rel (0) target = $region65
    $region64: #{forward.1} parent=1 // pred_region
      _
    $region65: #{forward.1} parent=1 // pred_fallthru
      _
    %1153 = vsyncpa [#allocation3], 1

</llo_original>
